<compile_context>
chip_gen: v6e
topology: v6e:2x2x1
jax: 0.10.0
libtpu: 0.0.40
codegen_flags: <defaults>
</compile_context>

<pallas_src>
import jax
import jax.numpy as jnp
from jax.experimental import pallas as pl
from jax.experimental.pallas import tpu as pltpu


C_IN = 64          # backbone output channels
C_LOGIT = 2        # binary segmentation logits
C_EMB = 3          # embedding dimensions
C_HEADS = C_LOGIT + C_EMB   # 5 output rows of the fused matmul
C_PAD = 8                   # fused weight rows padded to a sublane multiple


def _heads_kernel(x_ref, w_ref, b_ref, emb_ref, logit_ref):
    """Fused channel-major 1x1 convs: acc = W_all @ x + b_all (single MXU pass)."""
    x = x_ref[...]                                             # (64, tile), native dtype
    acc = jnp.dot(w_ref[...], x, preferred_element_type=jnp.float32)
    acc = acc + b_ref[...]                                     # (8, tile) + (8, 1)
    # Rows 0:2 -> logit head, rows 2:5 -> embedding head; padded rows 5:8 dropped.
    logit_ref[...] = acc[0:C_LOGIT, :].astype(logit_ref.dtype)
    emb_ref[...] = acc[C_LOGIT:C_HEADS, :].astype(emb_ref.dtype)


def _round_down(v, m):
    return (v // m) * m


def _round_up(v, m):
    return -(-v // m) * m


def _choose_tile(hw, requested, batch):
    """Lane-dense spatial tile: full extent or a multiple of 128, <= 32768 cols.

    Also ensures batch * num_spatial_blocks >= 2 whenever possible so the
    ("parallel", "parallel") grid can be split across v7x's two TensorCores.
    """
    requested = max(128, min(int(requested), 32768))
    if hw <= requested:
        tile = hw                                  # block == full dim: always legal
    else:
        tile = _round_down(requested, 128)
    # Keep at least 2 grid steps total (megacore) when the spatial dim allows it.
    steps = -(-hw // tile)
    if batch * steps < 2 and hw > 128:
        tile = min(tile, max(128, _round_up(-(-hw // 2), 128)))
    return tile


def lanenet_heads(x_nchw, w_logit, b_logit, w_emb, b_emb, *, t_hw=16384):
    """Compute (embedding, logit) heads of LaneNet_ICNet_1E1D.

    Args:
      x_nchw : (B, 64, H, W)  backbone feature map (NCHW, like PyTorch).
               May be f32 or bf16; bf16 halves the dominant HBM read.
      w_logit: (2, 64, 1, 1)  Conv2d weight (PyTorch layout: out, in, kH, kW).
      b_logit: (2,)           Conv2d bias.
      w_emb  : (64, 3, 1, 1)  ConvTranspose2d weight (in, out, kH, kW).
      b_emb  : (3,)           ConvTranspose2d bias.
      t_hw   : requested spatial tile width (columns of H*W).

    Returns:
      (embedding (B, 3, H, W), logit (B, 2, H, W))  -- NCHW, matching PyTorch.

    Note: weights are cast to x.dtype (f32 accumulation on the MXU); with bf16
    inputs this differs marginally from PyTorch's f32 conv.
    """
    B, C, H, W = x_nchw.shape
    assert C == C_IN
    HW = H * W
    x_dtype = x_nchw.dtype

    # NCHW -> (B, C, H*W): free reshape (channel-major layout preserved).
    x_flat = x_nchw.reshape(B, C_IN, HW)

    # 1x1 Conv2d:             logit[o] = sum_i W[o, i] * x[i]  -> (2, 64) @ x
    # 1x1 s1 ConvTranspose2d:   emb[o] = sum_i W[i, o] * x[i]  -> (3, 64) @ x
    wl_mat = w_logit.reshape(C_LOGIT, C_IN)                          # (2, 64)
    we_mat = jnp.transpose(w_emb.reshape(C_IN, C_EMB))               # (3, 64)
    w_all = jnp.concatenate([wl_mat, we_mat], axis=0)                # (5, 64)
    w_all = jnp.pad(w_all, ((0, C_PAD - C_HEADS), (0, 0))).astype(x_dtype)   # (8, 64)
    b_all = jnp.concatenate([b_logit, b_emb]).reshape(C_HEADS, 1)
    b_all = jnp.pad(b_all, ((0, C_PAD - C_HEADS), (0, 0))).astype(jnp.float32)  # (8, 1)

    tile = _choose_tile(HW, t_hw, B)
    grid = (B, pl.cdiv(HW, tile))

    itemsize = jnp.dtype(x_dtype).itemsize
    cost = pl.CostEstimate(
        flops=2 * B * HW * C_IN * C_HEADS,
        transcendentals=0,
        bytes_accessed=(
            B * HW * C_IN * itemsize                       # read x
            + B * HW * C_HEADS * itemsize                  # write outputs
            + w_all.size * itemsize
            + b_all.size * 4
        ),
    )

    # Double-buffered working set (input + both output tiles); bump the scoped
    # VMEM limit only if it would exceed the 32 MiB default (v7x-safe).
    vmem_need = 2 * (C_IN + C_HEADS) * tile * itemsize + 2 * (w_all.size * itemsize + b_all.size * 4)
    compiler_kwargs = dict(dimension_semantics=("parallel", "parallel"))
    if vmem_need > 30 * 1024 * 1024:
        compiler_kwargs["vmem_limit_bytes"] = int(min(2 * vmem_need, 100 * 1024 * 1024))

    emb_flat, logit_flat = pl.pallas_call(
        _heads_kernel,
        out_shape=(
            jax.ShapeDtypeStruct((B, C_EMB, HW), x_dtype),
            jax.ShapeDtypeStruct((B, C_LOGIT, HW), x_dtype),
        ),
        grid_spec=pltpu.PrefetchScalarGridSpec(
            num_scalar_prefetch=0,
            grid=grid,
            in_specs=[
                pl.BlockSpec((None, C_IN, tile), lambda b, s: (b, 0, s)),
                pl.BlockSpec((C_PAD, C_IN), lambda b, s: (0, 0)),
                pl.BlockSpec((C_PAD, 1), lambda b, s: (0, 0)),
            ],
            out_specs=[
                pl.BlockSpec((None, C_EMB, tile), lambda b, s: (b, 0, s)),
                pl.BlockSpec((None, C_LOGIT, tile), lambda b, s: (b, 0, s)),
            ],
        ),
        compiler_params=pltpu.CompilerParams(**compiler_kwargs),
        cost_estimate=cost,
    )(x_flat, w_all, b_all)

    # (B, C, H*W) -> (B, C, H, W): free reshape, already NCHW.
    embedding = emb_flat.reshape(B, C_EMB, H, W)
    logit = logit_flat.reshape(B, C_LOGIT, H, W)
    return embedding, logit


def _reference(x, w_logit, b_logit, w_emb, b_emb):
    """Pure-JAX reference (same math as the PyTorch 1x1 conv / conv-transpose)."""
    B, _, H, W = x.shape
    xf = jnp.transpose(x, (0, 2, 3, 1)).reshape(-1, C_IN).astype(jnp.float32)
    wl = w_logit.reshape(C_LOGIT, C_IN).astype(jnp.float32)
    we = w_emb.reshape(C_IN, C_EMB).astype(jnp.float32)
    logit = xf @ wl.T + b_logit[None, :].astype(jnp.float32)
    emb = xf @ we + b_emb[None, :].astype(jnp.float32)
    logit = jnp.transpose(logit.reshape(B, H, W, C_LOGIT), (0, 3, 1, 2))
    emb = jnp.transpose(emb.reshape(B, H, W, C_EMB), (0, 3, 1, 2))
    return emb, logit


if __name__ == "__main__":
    key = jax.random.PRNGKey(0)
    k_x, k_wl, k_bl, k_we, k_be, k_x2 = jax.random.split(key, 6)

    B, H, W = 2, 16, 16
    # Backbone (ICNet) output feature map, 64 channels, NCHW.
    x = jax.random.normal(k_x, (B, C_IN, H, W), dtype=jnp.float32)

    # Deterministic synthetic parameters (shapes from the module's __init__).
    w_logit = jax.random.normal(k_wl, (C_LOGIT, C_IN, 1, 1), jnp.float32) * 0.05
    b_logit = jax.random.normal(k_bl, (C_LOGIT,), jnp.float32) * 0.05
    w_emb = jax.random.normal(k_we, (C_IN, C_EMB, 1, 1), jnp.float32) * 0.05
    b_emb = jax.random.normal(k_be, (C_EMB,), jnp.float32) * 0.05

    # --- Test 1: f32, full-extent spatial block. ---
    embedding, logit = lanenet_heads(x, w_logit, b_logit, w_emb, b_emb)
    jax.block_until_ready((embedding, logit))
    emb_ref, logit_ref = _reference(x, w_logit, b_logit, w_emb, b_emb)
    assert embedding.shape == (B, C_EMB, H, W)
    assert logit.shape == (B, C_LOGIT, H, W)
    assert jnp.allclose(embedding, emb_ref, atol=1e-4, rtol=1e-4)
    assert jnp.allclose(logit, logit_ref, atol=1e-4, rtol=1e-4)

    # --- Test 2: ragged spatial extent (HW=324 not a multiple of 128/tile),
    #     B=1, small forced tile -> exercises partial-tail masking. ---
    B2, H2, W2 = 1, 18, 18
    x2 = jax.random.normal(k_x2, (B2, C_IN, H2, W2), dtype=jnp.float32)
    emb2, logit2 = lanenet_heads(x2, w_logit, b_logit, w_emb, b_emb, t_hw=128)
    jax.block_until_ready((emb2, logit2))
    emb2_ref, logit2_ref = _reference(x2, w_logit, b_logit, w_emb, b_emb)
    assert jnp.allclose(emb2, emb2_ref, atol=1e-4, rtol=1e-4)
    assert jnp.allclose(logit2, logit2_ref, atol=1e-4, rtol=1e-4)

    # --- Test 3: bf16 activations (halves the dominant x read). ---
    x_bf16 = x.astype(jnp.bfloat16)
    emb3, logit3 = lanenet_heads(x_bf16, w_logit, b_logit, w_emb, b_emb)
    jax.block_until_ready((emb3, logit3))
    assert emb3.dtype == jnp.bfloat16 and logit3.dtype == jnp.bfloat16
    emb3_ref, logit3_ref = _reference(x_bf16, w_logit.astype(jnp.bfloat16),
                                      b_logit, w_emb.astype(jnp.bfloat16), b_emb)
    assert jnp.allclose(emb3.astype(jnp.float32), emb3_ref, atol=5e-2, rtol=5e-2)
    assert jnp.allclose(logit3.astype(jnp.float32), logit3_ref, atol=5e-2, rtol=5e-2)

    print("KERNEL_OK")
</pallas_src>

<mosaic_0001>
module attributes {stable_mosaic.version = 11 : i64} {
  func.func @_heads_kernel(%arg0: i32, %arg1: i32, %arg2: memref<1x64x256xf32, #tpu.memory_space<vmem>>, %arg3: memref<8x64xf32, #tpu.memory_space<vmem>>, %arg4: memref<8x1xf32, #tpu.memory_space<vmem>>, %arg5: memref<1x3x256xf32, #tpu.memory_space<vmem>>, %arg6: memref<1x2x256xf32, #tpu.memory_space<vmem>>) attributes {dimension_semantics = [#tpu.dimension_semantics<parallel>, #tpu.dimension_semantics<parallel>], iteration_bounds = array<i64: 2, 1>, scalar_prefetch = 0 : i64, scratch_operands = 0 : i64, tpu.core_type = #tpu.core_type<tc>, window_params = [{transform_indices = @transform_0, window_bounds = array<i64: 1, 64, 256>}, {pipeline_mode = #tpu.pipeline_mode<synchronous>, transform_indices = @transform_1, window_bounds = array<i64: 8, 64>}, {pipeline_mode = #tpu.pipeline_mode<synchronous>, transform_indices = @transform_2, window_bounds = array<i64: 8, 1>}, {transform_indices = @transform_3, window_bounds = array<i64: 1, 3, 256>}, {transform_indices = @transform_4, window_bounds = array<i64: 1, 2, 256>}]} {
    %c0 = arith.constant 0 : index
    %c0_0 = arith.constant 0 : index
    %c0_1 = arith.constant 0 : index
    %0 = vector.load %arg2[%c0, %c0_0, %c0_1] : memref<1x64x256xf32, #tpu.memory_space<vmem>>, vector<1x64x256xf32>
    %1 = vector.shape_cast %0 : vector<1x64x256xf32> to vector<64x256xf32>
    %c0_2 = arith.constant 0 : index
    %c0_3 = arith.constant 0 : index
    %2 = vector.load %arg3[%c0_2, %c0_3] : memref<8x64xf32, #tpu.memory_space<vmem>>, vector<8x64xf32>
    %cst = arith.constant dense<0.000000e+00> : vector<8x256xf32>
    %3 = tpu.matmul %2, %1, %cst {dimension_numbers = #tpu.dot_dimension_numbers<[1], [0], [0], [1], [0, 0, 1, 1], [], []>} : vector<8x64xf32>, vector<64x256xf32>, vector<8x256xf32> -> vector<8x256xf32>
    %c0_4 = arith.constant 0 : index
    %c0_5 = arith.constant 0 : index
    %4 = vector.load %arg4[%c0_4, %c0_5] : memref<8x1xf32, #tpu.memory_space<vmem>>, vector<8x1xf32>
    %5 = vector.broadcast %4 : vector<8x1xf32> to vector<8x256xf32>
    %6 = arith.addf %3, %5 : vector<8x256xf32>
    %7 = vector.extract_strided_slice %6 {offsets = [0, 0], sizes = [2, 256], strides = [1, 1]} : vector<8x256xf32> to vector<2x256xf32>
    %c0_6 = arith.constant 0 : index
    %c0_7 = arith.constant 0 : index
    %c0_8 = arith.constant 0 : index
    %8 = vector.load %arg6[%c0_6, %c0_7, %c0_8] : memref<1x2x256xf32, #tpu.memory_space<vmem>>, vector<1x2x256xf32>
    %9 = vector.shape_cast %8 : vector<1x2x256xf32> to vector<2x256xf32>
    %10 = vector.shape_cast %7 : vector<2x256xf32> to vector<1x2x256xf32>
    tpu.vector_store %arg6[%c0_6, %c0_7, %c0_8], %10 {strides = array<i32>} : memref<1x2x256xf32, #tpu.memory_space<vmem>>, vector<1x2x256xf32>,
    %11 = vector.extract_strided_slice %6 {offsets = [2, 0], sizes = [3, 256], strides = [1, 1]} : vector<8x256xf32> to vector<3x256xf32>
    %c0_9 = arith.constant 0 : index
    %c0_10 = arith.constant 0 : index
    %c0_11 = arith.constant 0 : index
    %12 = vector.load %arg5[%c0_9, %c0_10, %c0_11] : memref<1x3x256xf32, #tpu.memory_space<vmem>>, vector<1x3x256xf32>
    %13 = vector.shape_cast %12 : vector<1x3x256xf32> to vector<3x256xf32>
    %14 = vector.shape_cast %11 : vector<3x256xf32> to vector<1x3x256xf32>
    tpu.vector_store %arg5[%c0_9, %c0_10, %c0_11], %14 {strides = array<i32>} : memref<1x3x256xf32, #tpu.memory_space<vmem>>, vector<1x3x256xf32>,
    return
  }
  func.func @transform_0(%arg0: i32, %arg1: i32) -> (i32, i32, i32) {
    %c0_i32 = arith.constant 0 : i32
    %c0_i32_0 = arith.constant 0 : i32
    return %arg0, %c0_i32, %arg1 : i32, i32, i32
  }
  func.func @transform_1(%arg0: i32, %arg1: i32) -> (i32, i32) {
    %c0_i32 = arith.constant 0 : i32
    %c0_i32_0 = arith.constant 0 : i32
    %c0_i32_1 = arith.constant 0 : i32
    return %c0_i32, %c0_i32_0 : i32, i32
  }
  func.func @transform_2(%arg0: i32, %arg1: i32) -> (i32, i32) {
    %c0_i32 = arith.constant 0 : i32
    %c0_i32_0 = arith.constant 0 : i32
    %c0_i32_1 = arith.constant 0 : i32
    return %c0_i32, %c0_i32_0 : i32, i32
  }
  func.func @transform_3(%arg0: i32, %arg1: i32) -> (i32, i32, i32) {
    %c0_i32 = arith.constant 0 : i32
    %c0_i32_0 = arith.constant 0 : i32
    return %arg0, %c0_i32, %arg1 : i32, i32, i32
  }
  func.func @transform_4(%arg0: i32, %arg1: i32) -> (i32, i32, i32) {
    %c0_i32 = arith.constant 0 : i32
    %c0_i32_0 = arith.constant 0 : i32
    return %arg0, %c0_i32, %arg1 : i32, i32, i32
  }
}

</mosaic_0001>

<llo_original>
// kernel: tpu_custom_call.1
$region0: #{tpu_custom_call.1}
  #allocation0 [shape = 'u32[]', space=smem, size = 0x4, offset = 0x4, fixed_abs, tag = 'smem constant byte address 0x4 - core index']
  #allocation1 [shape = 'u32[144,128]{1,0:T(1,128)}', space=vmem, size = 0x12000, scoped, tag = 'internal scratch']
  %s0 = inlined_call_operand.hbm [shape: f32[2,64,256], index: 0, kind: input, shape index: {}]
  %s1 = inlined_call_operand.vmem [shape: f32[8,64], index: 1, kind: input, shape index: {}]
  %s2 = inlined_call_operand.vmem [shape: f32[8,1], index: 2, kind: input, shape index: {}]
  %s3 = inlined_call_operand.vmem [shape: f32[2,3,256], index: 3, kind: output, shape index: {0}]
  %s4 = inlined_call_operand.hbm [shape: f32[2,2,256], index: 4, kind: output, shape index: {1}]
  %5 = xla_tuple %s3, %s4
  %s6 = sld [smem:[#allocation0]]
  $region57: #{tpu_custom_call.1} parent=0
    _
  %s8 = ssub.s32 1, %s6
  %s9 = scalar_select 0, %s8, %s6
  $region1: #{tpu_custom_call.1} parent=0
    #allocation2 [shape = 'u8[131072]{0}', space=vmem, size = 0x20000, scoped, tag = 'input window, operand 0']
    #allocation3 [shape = 's32[2]{0}', space=sflag, size = 0x8, scoped, tag = 'scoped memory for tpu_custom_call.1']
    #allocation4 [shape = 's32[2]{0}', space=sflag, size = 0x8, scoped, tag = 'scoped memory for tpu_custom_call.1']
    #allocation5 [shape = 'u8[4096]{0}', space=vmem, size = 0x1000, scoped, tag = 'output window, operand 1']
    %10 = vsyncpa [#allocation3], 0
    %s11 = scalar_lea.sflag [#allocation3], 1
    %12 = vsyncpa %s11, 0
    %13 = vsyncpa [#allocation4], 0
    %s14 = scalar_lea.sflag [#allocation4], 1
    %15 = vsyncpa %s14, 0
    loop: start=0, step=1, limit=4
    $region2: #{tpu_custom_call.1} parent=1 // loop_pre_header
      _
    $region3: #{tpu_custom_call.1} parent=1 // loop_header
      %s17 = sphi 0, %s21
      %p18 = scmp.ge.s32.totalorder %s17, 4
      %s24 = sphi 0, %s36
      %s25 = sphi 0, %s32
      %s26 = sphi 0, %s24
      %s27 = sphi 0, %s25
      %s28 = sphi 0, %s26
      %s29 = sphi 0, %s27
      %s41 = sphi 0, %s43
      %s44 = sphi 0, %s41
      %s45 = sphi 0, %s44
      %s61 = sphi 0, %s45
      %s65 = sphi 0, %s65
      %s67 = sphi 0, %s65
      %s68 = sphi 0, %s67
      %s82 = sphi 0, %s68
      %s86 = sphi 0, %s86
      %s88 = sphi 0, %s86
      %s89 = sphi 0, %s88
      %s103 = sphi 0, %s89
      %s111 = sphi 0, %s113
      %s114 = sphi 0, %s111
      %s115 = sphi 0, %s114
      %s131 = sphi 0, %s115
      %s139 = sphi 0, %s141
      %s142 = sphi 0, %s139
      %s143 = sphi 0, %s142
      %s159 = sphi 0, %s143
    $region4: #{tpu_custom_call.1} parent=1 // loop_header_branch
      %20 = sbr.rel (%p18) target = $region8
    $region5: #{tpu_custom_call.1} parent=1 // loop_body
      %s22 = ssub.s32 %s17, 1
      %s23 = ssub.s32 %s17, 2
      %s30 = sadd.s32 1, %s25
      %p31 = scmp.ge.s32.totalorder %s30, 1
      %s32 = scalar_select %p31, 0, %s30
      %s33 = sadd.s32 1, %s24
      %s34 = scalar_select %p31, %s33, %s24
      %p35 = scmp.ge.s32.totalorder %s34, 2
      %s36 = scalar_select %p35, 0, %s34
      %s37 = ssub.s32 %s24, %s36
      %s38 = ssub.s32 %s25, %s32
      %s39 = sor.u32 %s37, %s38
      %p40 = scmp.eq.s32.totalorder %s39, 0
      %s42 = sadd.s32 %s41, 1
      %s43 = scalar_select %p40, %s41, %s42
      %p46 = pneg %p40
      %p47 = scmp.eq.s32.totalorder %s17, 1
      %p48 = por %p46, %p47
      %p49 = scmp.ne.s32.totalorder %s41, %s44
      %p50 = scmp.eq.s32.totalorder %s17, 0
      %p51 = por %p49, %p50
      %p52 = scmp.ne.s32.totalorder %s41, %s44
      %p53 = scmp.eq.s32.totalorder %s22, 1
      %p54 = por %p52, %p53
      %p55 = scmp.ne.s32.totalorder %s44, %s45
      %p56 = scmp.eq.s32.totalorder %s22, 0
      %p57 = por %p55, %p56
      %p58 = scmp.ne.s32.totalorder %s44, %s45
      %p59 = scmp.eq.s32.totalorder %s23, 1
      %p60 = por %p58, %p59
      %p62 = scmp.ne.s32.totalorder %s45, %s61
      %p63 = scmp.eq.s32.totalorder %s23, 0
      %p64 = por %p62, %p63
      %s66 = sadd.s32 %s65, 1
      %p69 = scmp.eq.s32.totalorder %s17, 1
      %p70 = scmp.ne.s32.totalorder %s65, %s67
      %p71 = scmp.eq.s32.totalorder %s17, 0
      %p72 = por %p70, %p71
      %p73 = scmp.ne.s32.totalorder %s65, %s67
      %p74 = scmp.eq.s32.totalorder %s22, 1
      %p75 = por %p73, %p74
      %p76 = scmp.ne.s32.totalorder %s67, %s68
      %p77 = scmp.eq.s32.totalorder %s22, 0
      %p78 = por %p76, %p77
      %p79 = scmp.ne.s32.totalorder %s67, %s68
      %p80 = scmp.eq.s32.totalorder %s23, 1
      %p81 = por %p79, %p80
      %p83 = scmp.ne.s32.totalorder %s68, %s82
      %p84 = scmp.eq.s32.totalorder %s23, 0
      %p85 = por %p83, %p84
      %s87 = sadd.s32 %s86, 1
      %p90 = scmp.eq.s32.totalorder %s17, 1
      %p91 = scmp.ne.s32.totalorder %s86, %s88
      %p92 = scmp.eq.s32.totalorder %s17, 0
      %p93 = por %p91, %p92
      %p94 = scmp.ne.s32.totalorder %s86, %s88
      %p95 = scmp.eq.s32.totalorder %s22, 1
      %p96 = por %p94, %p95
      %p97 = scmp.ne.s32.totalorder %s88, %s89
      %p98 = scmp.eq.s32.totalorder %s22, 0
      %p99 = por %p97, %p98
      %p100 = scmp.ne.s32.totalorder %s88, %s89
      %p101 = scmp.eq.s32.totalorder %s23, 1
      %p102 = por %p100, %p101
      %p104 = scmp.ne.s32.totalorder %s89, %s103
      %p105 = scmp.eq.s32.totalorder %s23, 0
      %p106 = por %p104, %p105
      %s107 = ssub.s32 %s24, %s36
      %s108 = ssub.s32 %s25, %s32
      %s109 = sor.u32 %s107, %s108
      %p110 = scmp.eq.s32.totalorder %s109, 0
      %s112 = sadd.s32 %s111, 1
      %s113 = scalar_select %p110, %s111, %s112
      %p116 = pneg %p110
      %p117 = scmp.eq.s32.totalorder %s17, 1
      %p118 = por %p116, %p117
      %p119 = scmp.ne.s32.totalorder %s111, %s114
      %p120 = scmp.eq.s32.totalorder %s17, 0
      %p121 = por %p119, %p120
      %p122 = scmp.ne.s32.totalorder %s111, %s114
      %p123 = scmp.eq.s32.totalorder %s22, 1
      %p124 = por %p122, %p123
      %p125 = scmp.ne.s32.totalorder %s114, %s115
      %p126 = scmp.eq.s32.totalorder %s22, 0
      %p127 = por %p125, %p126
      %p128 = scmp.ne.s32.totalorder %s114, %s115
      %p129 = scmp.eq.s32.totalorder %s23, 1
      %p130 = por %p128, %p129
      %p132 = scmp.ne.s32.totalorder %s115, %s131
      %p133 = scmp.eq.s32.totalorder %s23, 0
      %p134 = por %p132, %p133
      %s135 = ssub.s32 %s24, %s36
      %s136 = ssub.s32 %s25, %s32
      %s137 = sor.u32 %s135, %s136
      %p138 = scmp.eq.s32.totalorder %s137, 0
      %s140 = sadd.s32 %s139, 1
      %s141 = scalar_select %p138, %s139, %s140
      %p144 = pneg %p138
      %p145 = scmp.eq.s32.totalorder %s17, 1
      %p146 = por %p144, %p145
      %p147 = scmp.ne.s32.totalorder %s139, %s142
      %p148 = scmp.eq.s32.totalorder %s17, 0
      %p149 = por %p147, %p148
      %p150 = scmp.ne.s32.totalorder %s139, %s142
      %p151 = scmp.eq.s32.totalorder %s22, 1
      %p152 = por %p150, %p151
      %p153 = scmp.ne.s32.totalorder %s142, %s143
      %p154 = scmp.eq.s32.totalorder %s22, 0
      %p155 = por %p153, %p154
      %p156 = scmp.ne.s32.totalorder %s142, %s143
      %p157 = scmp.eq.s32.totalorder %s23, 1
      %p158 = por %p156, %p157
      %p160 = scmp.ne.s32.totalorder %s143, %s159
      %p161 = scmp.eq.s32.totalorder %s23, 0
      %p162 = por %p160, %p161
      %p163 = scmp.le.s32.totalorder 1, %s17
      %p164 = scmp.lt.s32.totalorder %s17, 3
      %p165 = pnand %p163, %p164
      %p166 = pneg %p165
      // Predicated region
      $region9: #{tpu_custom_call.1} parent=5 // pred_check
        _
      $region10: #{tpu_custom_call.1} parent=5 // pred_check_branch
        %168 = sbr.rel (%p165) target = $region12
      $region11: #{tpu_custom_call.1} parent=5 // pred_region
        %s169 = ssub.s32 %s17, 1
        // Predicated region
        $region13: #{tpu_custom_call.1} parent=11 // pred_check
          %p170 = pneg %p78
        $region14: #{tpu_custom_call.1} parent=11 // pred_check_branch
          %172 = sbr.rel (%p170) target = $region16
        $region15: #{tpu_custom_call.1} parent=11 // pred_region
          _
        $region16: #{tpu_custom_call.1} parent=11 // pred_fallthru
          _
        // Predicated region
        $region17: #{tpu_custom_call.1} parent=11 // pred_check
          %p173 = pneg %p99
        $region18: #{tpu_custom_call.1} parent=11 // pred_check_branch
          %175 = sbr.rel (%p173) target = $region20
        $region19: #{tpu_custom_call.1} parent=11 // pred_region
          _
        $region20: #{tpu_custom_call.1} parent=11 // pred_fallthru
          _
      $region12: #{tpu_custom_call.1} parent=5 // pred_fallthru
        _
      %p176 = scmp.lt.s32.totalorder %s17, 2
      // Predicated region
      $region21: #{tpu_custom_call.1} parent=5 // pred_check
        %p177 = pneg %p176
      $region22: #{tpu_custom_call.1} parent=5 // pred_check_branch
        %179 = sbr.rel (%p177) target = $region24
      $region23: #{tpu_custom_call.1} parent=5 // pred_region
        // Predicated region
        $region25: #{tpu_custom_call.1} parent=23 // pred_check
          %p180 = pneg %p51
        $region26: #{tpu_custom_call.1} parent=23 // pred_check_branch
          %182 = sbr.rel (%p180) target = $region28
        $region27: #{tpu_custom_call.1} parent=23 // pred_region
          %s183 = sand.u32 %s41, 1
          %s184 = scalar_lea.sflag [#allocation3], %s183
          %s185 = sand.u32 %s41, 1
          %s186 = smul.addr %s185, 128
          %s187 = scalar_lea.vmem [#allocation2], %s186
          %s188 = smul.u32 2, %s25
          %s190 = ssub.s32 2048, 2048
          %191 = vsyncadd %s184, %s190
          %s192 = smul.addr %s24, 16
          %s193 = sadd.s32 %s188, %s192
          %s194 = smul.addr %s193, 128
          %s195 = scalar_lea.hbm %s0, %s194
          %s196 = sshll.u32 %s187, 4
          %s197 = int_to_ptr.vmem [resolvable:$true] %s196
          %202 = dma.hbm_to_vmem [thread:$0]  %s195, 2048, %s197, %s184, 256, 256, 16
        $region28: #{tpu_custom_call.1} parent=23 // pred_fallthru
          _
      $region24: #{tpu_custom_call.1} parent=5 // pred_fallthru
        _
      %p203 = scmp.le.s32.totalorder 1, %s17
      %p204 = scmp.lt.s32.totalorder %s17, 3
      %p205 = pnand %p203, %p204
      %p206 = pneg %p205
      // Predicated region
      $region29: #{tpu_custom_call.1} parent=5 // pred_check
        _
      $region30: #{tpu_custom_call.1} parent=5 // pred_check_branch
        %208 = sbr.rel (%p205) target = $region32
      $region31: #{tpu_custom_call.1} parent=5 // pred_region
        %s209 = ssub.s32 %s17, 1
        %s210 = sand.u32 %s44, 1
        %s211 = scalar_lea.sflag [#allocation3], %s210
        %s212 = sand.u32 %s44, 1
        %s213 = smul.addr %s212, 128
        %s214 = scalar_lea.vmem [#allocation2], %s213
        // Predicated region
        $region33: #{tpu_custom_call.1} parent=31 // pred_check
          %p215 = pneg %p57
        $region34: #{tpu_custom_call.1} parent=31 // pred_check_branch
          %217 = sbr.rel (%p215) target = $region36
        $region35: #{tpu_custom_call.1} parent=31 // pred_region
          %218 = dma.done %s211, 2048
        $region36: #{tpu_custom_call.1} parent=31 // pred_fallthru
          _
        %s219 = sand.u32 %s44, 1
        %s220 = scalar_lea.sflag [#allocation3], %s219
        %s221 = sand.u32 %s44, 1
        %s222 = smul.addr %s221, 128
        %s223 = scalar_lea.vmem [#allocation2], %s222
        %p224 = pneg %p57
        %p225 = pneg %p54
        %p226 = pneg %p78
        %p227 = pneg %p75
        %p228 = pneg %p99
        %p229 = pneg %p96
        %p230 = pneg %p127
        %p231 = pneg %p124
        %s232 = smul.u32 2, %s27
        %p233 = scmp.lt.s32.totalorder %s26, 1
        %s234 = scalar_select %p233, %s26, 1
        %p235 = scmp.lt.s32.totalorder %s232, 1
        %s236 = scalar_select %p235, %s232, 1
        %s237 = smul.addr %s234, 2
        %s238 = sadd.s32 %s236, %s237
        %s239 = smul.addr %s238, 4
        %s240 = scalar_lea.vmem %s3, %s239
        %p241 = pneg %p155
        %p242 = pneg %p152
        %s243 = sand.u32 %s142, 1
        %s244 = scalar_lea.sflag [#allocation4], %s243
        %s245 = sand.u32 %s142, 1
        %s246 = smul.addr %s245, 4
        %s247 = scalar_lea.vmem [#allocation5], %s246
        %s248 = smul.u32 2, %s27
        %s249 = smul.u32 2, %s27
        %p250 = scmp.lt.s32.totalorder %s26, 1
        %s251 = scalar_select %p250, %s26, 1
        %p252 = scmp.lt.s32.totalorder %s249, 1
        %s253 = scalar_select %p252, %s249, 1
        %s254 = smul.addr %s251, 2
        %s255 = sadd.s32 %s253, %s254
        %s256 = smul.addr %s255, 4
        %s257 = scalar_lea.vmem %s3, %s256
        %s258 = smul.u32 2, %s27
        %s259 = smul.u32 2, %s27
        %v260 = vld [vmem:[%s214] sm:$0xff]
        %v261 = vld [vmem:[%s214 + $0x8] sm:$0xff]
        %v262 = vld [vmem:[%s214 + $0x10] sm:$0xff]
        %v263 = vld [vmem:[%s214 + $0x18] sm:$0xff]
        %v264 = vld [vmem:[%s214 + $0x20] sm:$0xff]
        %v265 = vld [vmem:[%s214 + $0x28] sm:$0xff]
        %v266 = vld [vmem:[%s214 + $0x30] sm:$0xff]
        %v267 = vld [vmem:[%s214 + $0x38] sm:$0xff]
        %v268 = vld [vmem:[%s214 + $0x40] sm:$0xff]
        %v269 = vld [vmem:[%s214 + $0x48] sm:$0xff]
        %v270 = vld [vmem:[%s214 + $0x50] sm:$0xff]
        %v271 = vld [vmem:[%s214 + $0x58] sm:$0xff]
        %v272 = vld [vmem:[%s214 + $0x60] sm:$0xff]
        %v273 = vld [vmem:[%s214 + $0x68] sm:$0xff]
        %v274 = vld [vmem:[%s214 + $0x70] sm:$0xff]
        %v275 = vld [vmem:[%s214 + $0x78] sm:$0xff]
        %v276 = vld [vmem:[%s1] sm:$0xff]
        %v277 = vld [vmem:[%s2] sm:$0xff]
        %279 = vset.pattern.permute.xlu0 0
        %280 = vperm.xlu0 %279, %v277
        %v281 = vpop.permute.xlu0 %280
        %vm283 = vcmask 523264
        %v285 = vsel %vm283, %v276, 0
        %287 = vmatprep.subr.mxu0 0.0
        %288 = vmatpush1.msra.mxu0 0.0
        %289 = vmatprep.subr.mxu0 0.0
        %290 = vmatpush1.msra.mxu0 0.0
        %291 = vmatprep.subr.mxu0 0.0
        %292 = vmatpush1.msra.mxu0 0.0
        %293 = vmatprep.subr.mxu0 0.0
        %294 = vmatpush1.msra.mxu0 0.0
        %295 = vmatprep.subr.mxu0 0.0
        %296 = vmatpush1.msra.mxu0 0.0
        %297 = vmatprep.subr.mxu0 0.0
        %298 = vmatpush1.msra.mxu0 0.0
        %299 = vmatprep.subr.mxu0 0.0
        %300 = vmatpush1.msra.mxu0 0.0
        %301 = vmatprep.subr.mxu0 0.0
        %302 = vmatpush1.msra.mxu0 0.0
        %303 = vmatprep.subr.mxu0 %v275
        %304 = vmatpush1.msra.mxu0 %v274
        %305 = vmatprep.subr.mxu0 %v273
        %306 = vmatpush1.msra.mxu0 %v272
        %307 = vmatprep.subr.mxu0 %v271
        %308 = vmatpush1.msra.mxu0 %v270
        %309 = vmatprep.subr.mxu0 %v269
        %310 = vmatpush1.msra.mxu0 %v268
        %311 = vmatprep.subr.mxu0 %v267
        %312 = vmatpush1.msra.mxu0 %v266
        %313 = vmatprep.subr.mxu0 %v265
        %314 = vmatpush1.msra.mxu0 %v264
        %315 = vmatprep.subr.mxu0 %v263
        %316 = vmatpush1.msra.mxu0 %v262
        %317 = vmatprep.subr.mxu0 %v261
        %318 = vmatpush1.msra.mxu0 %v260
        %319 = vmatprep.subr.mxu0 0.0
        %320 = vmatpush2.msra.mxu0 0.0
        %321 = vmatprep.subr.mxu0 0.0
        %322 = vmatpush2.msra.mxu0 0.0
        %323 = vmatprep.subr.mxu0 0.0
        %324 = vmatpush2.msra.mxu0 0.0
        %325 = vmatprep.subr.mxu0 0.0
        %326 = vmatpush2.msra.mxu0 0.0
        %327 = vmatprep.subr.mxu0 0.0
        %328 = vmatpush2.msra.mxu0 0.0
        %329 = vmatprep.subr.mxu0 0.0
        %330 = vmatpush2.msra.mxu0 0.0
        %331 = vmatprep.subr.mxu0 0.0
        %332 = vmatpush2.msra.mxu0 0.0
        %333 = vmatprep.subr.mxu0 0.0
        %334 = vmatpush2.msra.mxu0 0.0
        %335 = vmatprep.subr.mxu0 0.0
        %336 = vmatpush2.msra.mxu0 0.0
        %337 = vmatprep.subr.mxu0 0.0
        %338 = vmatpush2.msra.mxu0 0.0
        %339 = vmatprep.subr.mxu0 0.0
        %340 = vmatpush2.msra.mxu0 0.0
        %341 = vmatprep.subr.mxu0 0.0
        %342 = vmatpush2.msra.mxu0 0.0
        %343 = vmatprep.subr.mxu0 0.0
        %344 = vmatpush2.msra.mxu0 0.0
        %345 = vmatprep.subr.mxu0 0.0
        %346 = vmatpush2.msra.mxu0 0.0
        %347 = vmatprep.subr.mxu0 0.0
        %348 = vmatpush2.msra.mxu0 0.0
        %349 = vmatprep.subr.mxu0 0.0
        %350 = vmatpush2.msra.mxu0 0.0
        %351 = vmatprep.mubr.f32.mxu0 0.0
        %352 = vmatmul.mubr.f32.gmra.mxu0 %v285
        %v353 = vpop.f32.mrf.mxu0
        %v354 = vadd.f32 %v281, %v353
        %v355 = vpop.f32.mrf.mxu0
        %v356 = vadd.f32 %v281, %v355
        %357 = vdwg.mxu0
        %v360 = vcombine.low %v354, %v356
        %v362 = vunpack.c.l.s4 1983009808
        %v363 = vunpack.c.0.s8 %v362
        %v364 = vlaneseq
        %v365 = vshrl.u32 %v364, 7
        %v366 = vsub.s32 %v363, %v365
        %v367 = vrot.slane %v360, %v366
        %369 = vst [vmem:[%s247] sm:$0xf] %v367
        %v370 = vcombine.high %v354, %v356
        %vm371 = vcmask 1041408
        %vm372 = vcmask 1045508
        %vm373 = vmor %vm371, %vm372
        %v374 = vrot.slane %v360, 6
        %v375 = vrot.slane %v374, 4
        %v376 = vrot.slane %v370, 6
        %v377 = vsel %vm373, %v375, %v376
        %379 = vst [vmem:[%s257] sm:$0x77] %v377
        %s380 = smul.u32 2, %s27
        %p381 = scmp.lt.s32.totalorder %s26, 1
        %s382 = scalar_select %p381, %s26, 1
        %p383 = scmp.lt.s32.totalorder %s380, 1
        %s384 = scalar_select %p383, %s380, 1
        %s385 = smul.addr %s382, 2
        %s386 = sadd.s32 %s384, %s385
        %s387 = smul.addr %s386, 4
        %s388 = scalar_lea.vmem %s3, %s387
        %s389 = sand.u32 %s142, 1
        %s390 = scalar_lea.sflag [#allocation4], %s389
        %s391 = sand.u32 %s142, 1
        %s392 = smul.addr %s391, 4
        %s393 = scalar_lea.vmem [#allocation5], %s392
        // Predicated region
        $region37: #{tpu_custom_call.1} parent=31 // pred_check
          %p394 = pneg %p124
        $region38: #{tpu_custom_call.1} parent=31 // pred_check_branch
          %396 = sbr.rel (%p394) target = $region40
        $region39: #{tpu_custom_call.1} parent=31 // pred_region
          %s397 = smul.u32 2, %s27
        $region40: #{tpu_custom_call.1} parent=31 // pred_fallthru
          _
        // Predicated region
        $region41: #{tpu_custom_call.1} parent=31 // pred_check
          %p398 = pneg %p152
        $region42: #{tpu_custom_call.1} parent=31 // pred_check_branch
          %400 = sbr.rel (%p398) target = $region44
        $region43: #{tpu_custom_call.1} parent=31 // pred_region
          %s401 = smul.u32 2, %s27
          %s403 = ssub.s32 64, 64
          %404 = vsyncadd %s390, %s403
          %s405 = smul.addr %s26, 2
          %s406 = sadd.s32 %s401, %s405
          %s407 = smul.addr %s406, 32
          %s408 = scalar_lea.hbm %s4, %s407
          %s410 = sshll.u32 %s393, 4
          %s411 = int_to_ptr.vmem [resolvable:$true] %s410
          %413 = dma.vmem_to_hbm [thread:$0]  %s411, 64, %s408, %s390
        $region44: #{tpu_custom_call.1} parent=31 // pred_fallthru
          _
      $region32: #{tpu_custom_call.1} parent=5 // pred_fallthru
        _
      %p414 = scmp.le.s32.totalorder 2, %s17
      // Predicated region
      $region45: #{tpu_custom_call.1} parent=5 // pred_check
        %p415 = pneg %p414
      $region46: #{tpu_custom_call.1} parent=5 // pred_check_branch
        %417 = sbr.rel (%p415) target = $region48
      $region47: #{tpu_custom_call.1} parent=5 // pred_region
        %s418 = ssub.s32 %s17, 2
        // Predicated region
        $region49: #{tpu_custom_call.1} parent=47 // pred_check
          %p419 = pneg %p130
        $region50: #{tpu_custom_call.1} parent=47 // pred_check_branch
          %421 = sbr.rel (%p419) target = $region52
        $region51: #{tpu_custom_call.1} parent=47 // pred_region
          %s422 = smul.u32 2, %s29
          %p423 = scmp.lt.s32.totalorder %s28, 1
          %s424 = scalar_select %p423, %s28, 1
          %p425 = scmp.lt.s32.totalorder %s422, 1
          %s426 = scalar_select %p425, %s422, 1
          %s427 = smul.addr %s424, 2
          %s428 = sadd.s32 %s426, %s427
          %s429 = smul.addr %s428, 4
          %s430 = scalar_lea.vmem %s3, %s429
        $region52: #{tpu_custom_call.1} parent=47 // pred_fallthru
          _
        // Predicated region
        $region53: #{tpu_custom_call.1} parent=47 // pred_check
          %p431 = pneg %p158
        $region54: #{tpu_custom_call.1} parent=47 // pred_check_branch
          %433 = sbr.rel (%p431) target = $region56
        $region55: #{tpu_custom_call.1} parent=47 // pred_region
          %s434 = sand.u32 %s143, 1
          %s435 = scalar_lea.sflag [#allocation4], %s434
          %s436 = sand.u32 %s143, 1
          %s437 = smul.addr %s436, 4
          %s438 = scalar_lea.vmem [#allocation5], %s437
          %439 = dma.done %s435, 64
        $region56: #{tpu_custom_call.1} parent=47 // pred_fallthru
          _
      $region48: #{tpu_custom_call.1} parent=5 // pred_fallthru
        _
    $region6: #{tpu_custom_call.1} parent=1 // loop_footer
      %s21 = sadd.s32 1, %s17
    $region7: #{tpu_custom_call.1} parent=1 // loop_footer_branch
      %16 = sbr.rel target = $region3
    $region8: #{tpu_custom_call.1} parent=1 // loop_exit
      _
    %440 = vsyncpa [#allocation3], 1
    %s441 = scalar_lea.sflag [#allocation3], 1
    %442 = vsyncpa %s441, 1
    %443 = vsyncpa [#allocation4], 1
    %s444 = scalar_lea.sflag [#allocation4], 1
    %445 = vsyncpa %s444, 1

</llo_original>
